<compile_context>
chip_gen: v6e
topology: v6e:2x2x1
jax: 0.10.0
libtpu: 0.0.40
codegen_flags: <defaults>
</compile_context>

<pallas_src>
import jax
import jax.numpy as jnp
from jax.experimental import pallas as pl
from jax.experimental.pallas import tpu as pltpu

VMEM = pl.BlockSpec(memory_space=pltpu.MemorySpace.VMEM)


# ----------------------------- Pallas kernels ------------------------------ #

def _project_x_kernel(x_ref, w_ref, b_ref, o_ref):
    # Fused node projection [A|B|D|E] in one MXU matmul, lane-dense output.
    o_ref[...] = (jnp.dot(x_ref[...], w_ref[...],
                          preferred_element_type=jnp.float32) + b_ref[...])


def project_x(x, w_slab, b_slab):
    n = x.shape[0]
    cols = w_slab.shape[1]
    return pl.pallas_call(
        _project_x_kernel,
        out_shape=jax.ShapeDtypeStruct((n, cols), jnp.float32),
        in_specs=[VMEM, VMEM, VMEM],
        out_specs=VMEM,
    )(x, w_slab, b_slab.reshape(1, cols))


def _fused_gcn_kernel(dst_ref, xp_ref, xpi_ref, xpj_ref, e_ref,
                      wc_ref, bc_ref, gx_ref, bx_ref, ge_ref, be_ref,
                      xout_ref, eout_ref):
    d = bc_ref.shape[1]                   # out_dim
    n_nodes = xp_ref.shape[0]
    n_edges = xpi_ref.shape[0]

    # C projection of the raw edge features (fused here so Ce never hits HBM).
    ce = (jnp.dot(e_ref[...], wc_ref[...],
                  preferred_element_type=jnp.float32) + bc_ref[...])

    # Packed-slab column layout: [A | B | D | E].
    ax   = xp_ref[:, 0:d]                 # [n_nodes, d]
    bx_j = xpj_ref[:, d:2 * d]            # [n_edges, d]  (gathered by src)
    dx_i = xpi_ref[:, 2 * d:3 * d]        # [n_edges, d]  (gathered by dst)
    ex_j = xpj_ref[:, 3 * d:4 * d]        # [n_edges, d]  (gathered by src)

    # message(): e_ij and its gate.
    e_ij = dx_i + ex_j + ce
    sigma = jax.nn.sigmoid(e_ij)

    # aggregate(): scatter-sum over destination nodes expressed as a one-hot
    # matmul so the reduction runs on the MXU. num and den share ONE matmul
    # (64-wide payload) instead of two 32-wide ones.
    dst = dst_ref[...]                                            # [1, n_edges]
    node_ids = jax.lax.broadcasted_iota(jnp.int32, (n_nodes, n_edges), 0)
    onehot = (node_ids == dst).astype(jnp.float32)                # [n_nodes, n_edges]
    payload = jnp.concatenate([sigma * bx_j, sigma], axis=-1)     # [n_edges, 2d]
    agg = jnp.dot(onehot, payload, preferred_element_type=jnp.float32)
    num = agg[:, 0:d]
    den = agg[:, d:2 * d]

    # update(): x = Ax + num / (den + 1e-6).
    # (pl.reciprocal(..., approx=True) would offload to the EUP slot but adds
    #  ~1e-4 relative error; stay exact to keep the 1e-4 tolerance check.)
    inv_den = pl.reciprocal(den + 1e-6, approx=False)
    x_pre = ax + num * inv_den

    # BatchNorm1d in training mode (batch stats, biased variance, eps=1e-5)
    # followed by ReLU. dropout p=0.0 is a no-op; residual=False -> no skip.
    def bn_relu(v, gamma, beta):
        mean = jnp.mean(v, axis=0, keepdims=True)
        var = jnp.mean(jnp.square(v - mean), axis=0, keepdims=True)
        vhat = (v - mean) * jax.lax.rsqrt(var + 1e-5)
        return jnp.maximum(vhat * gamma + beta, 0.0)

    xout_ref[...] = bn_relu(x_pre, gx_ref[...], bx_ref[...])
    eout_ref[...] = bn_relu(e_ij, ge_ref[...], be_ref[...])


def fused_gcn(dst, xp, xp_i, xp_j, e, wc, bc, gx, bx, ge, be):
    n_nodes = xp.shape[0]
    n_edges = xp_i.shape[0]
    d = wc.shape[1]
    return pl.pallas_call(
        _fused_gcn_kernel,
        out_shape=(jax.ShapeDtypeStruct((n_nodes, d), jnp.float32),
                   jax.ShapeDtypeStruct((n_edges, d), jnp.float32)),
        in_specs=[VMEM] * 11,
        out_specs=(VMEM, VMEM),
    )(dst.reshape(1, n_edges).astype(jnp.int32), xp, xp_i, xp_j, e,
      wc, bc.reshape(1, d), gx.reshape(1, d), bx.reshape(1, d),
      ge.reshape(1, d), be.reshape(1, d))


# ------------------------------- parameters -------------------------------- #

def init_params(key, in_dim, out_dim):
    keys = jax.random.split(key, 10)

    def lin(kw, kb):
        lim = 1.0 / jnp.sqrt(jnp.float32(in_dim))
        w = jax.random.uniform(kw, (in_dim, out_dim), jnp.float32, -lim, lim)
        b = jax.random.uniform(kb, (out_dim,), jnp.float32, -lim, lim)
        return w, b

    params = {}
    for i, name in enumerate("ABCDE"):
        params[name] = lin(keys[2 * i], keys[2 * i + 1])
    # BatchNorm affine params (PyTorch init: gamma=1, beta=0)
    params["bn_x"] = (jnp.ones((out_dim,), jnp.float32),
                      jnp.zeros((out_dim,), jnp.float32))
    params["bn_e"] = (jnp.ones((out_dim,), jnp.float32),
                      jnp.zeros((out_dim,), jnp.float32))
    return params


def pack_params(params):
    # Pack A/B/D/E into one lane-dense [in_dim, 4*out_dim] slab (done once).
    w_slab = jnp.concatenate([params[n][0] for n in "ABDE"], axis=1)
    b_slab = jnp.concatenate([params[n][1] for n in "ABDE"], axis=0)
    return {
        "w_slab": w_slab, "b_slab": b_slab,
        "wc": params["C"][0], "bc": params["C"][1],
        "bn_x": params["bn_x"], "bn_e": params["bn_e"],
    }


# ------------------------------ forward pass ------------------------------- #

def gated_gcn_forward(packed, x, e, edge_index):
    """x: [n_nodes, in_dim], e: [n_edges, in_dim], edge_index: [2, n_edges]."""
    src = edge_index[0]   # j (source)  -- PyG flow = source_to_target
    dst = edge_index[1]   # i (target), also the scatter index

    xp = project_x(x, packed["w_slab"], packed["b_slab"])     # [n_nodes, 4d]

    # Row gathers are glue (data-dependent indexing) left to XLA; one
    # lane-dense gather per index set.
    xp_i = jnp.take(xp, dst, axis=0)                          # [n_edges, 4d]
    xp_j = jnp.take(xp, src, axis=0)                          # [n_edges, 4d]

    gx, bx = packed["bn_x"]
    ge, be = packed["bn_e"]
    return fused_gcn(dst, xp, xp_i, xp_j, e,
                     packed["wc"], packed["bc"], gx, bx, ge, be)


# ------------------------------ pure-JAX ref -------------------------------- #

def gated_gcn_ref(params, x, e, edge_index):
    def lin(x_, wb):
        w, b = wb
        return x_ @ w + b
    src, dst = edge_index[0], edge_index[1]
    Ax, Bx, Ce = lin(x, params["A"]), lin(x, params["B"]), lin(e, params["C"])
    Dx, Ex = lin(x, params["D"]), lin(x, params["E"])
    e_ij = Dx[dst] + Ex[src] + Ce
    sigma = jax.nn.sigmoid(e_ij)
    n = x.shape[0]
    num = jax.ops.segment_sum(sigma * Bx[src], dst, num_segments=n)
    den = jax.ops.segment_sum(sigma, dst, num_segments=n)
    x_out = Ax + num / (den + 1e-6)

    def bn_relu_ref(v, gb):
        g, b = gb
        m = v.mean(0, keepdims=True)
        var = ((v - m) ** 2).mean(0, keepdims=True)
        return jnp.maximum((v - m) / jnp.sqrt(var + 1e-5) * g + b, 0.0)

    return bn_relu_ref(x_out, params["bn_x"]), bn_relu_ref(e_ij, params["bn_e"])


# ---------------------------------- main ------------------------------------ #

if __name__ == "__main__":
    n_nodes, n_edges, in_dim, out_dim = 16, 48, 32, 32

    key = jax.random.PRNGKey(0)
    k_x, k_e, k_src, k_dst, k_p = jax.random.split(key, 5)

    x = jax.random.normal(k_x, (n_nodes, in_dim), jnp.float32)
    e = jax.random.normal(k_e, (n_edges, in_dim), jnp.float32)
    edge_index = jnp.stack([
        jax.random.randint(k_src, (n_edges,), 0, n_nodes, jnp.int32),
        jax.random.randint(k_dst, (n_edges,), 0, n_nodes, jnp.int32),
    ], axis=0)

    params = init_params(k_p, in_dim, out_dim)
    packed = pack_params(params)

    fwd = jax.jit(gated_gcn_forward)
    x_out, e_out = fwd(packed, x, e, edge_index)
    jax.block_until_ready((x_out, e_out))

    x_ref, e_ref = gated_gcn_ref(params, x, e, edge_index)
    assert jnp.allclose(x_out, x_ref, rtol=1e-4, atol=1e-4)
    assert jnp.allclose(e_out, e_ref, rtol=1e-4, atol=1e-4)

    print("KERNEL_OK")
</pallas_src>

<mosaic_0001>
module attributes {stable_mosaic.version = 11 : i64} {
  func.func @_project_x_kernel(%arg0: memref<16x32xf32, #tpu.memory_space<vmem>>, %arg1: memref<32x128xf32, #tpu.memory_space<vmem>>, %arg2: memref<1x128xf32, #tpu.memory_space<vmem>>, %arg3: memref<16x128xf32, #tpu.memory_space<vmem>>) attributes {dimension_semantics = [], scalar_prefetch = 0 : i64, scratch_operands = 0 : i64, tpu.core_type = #tpu.core_type<tc>} {
    %c0 = arith.constant 0 : index
    %c0_0 = arith.constant 0 : index
    %0 = vector.load %arg0[%c0, %c0_0] : memref<16x32xf32, #tpu.memory_space<vmem>>, vector<16x32xf32>
    %c0_1 = arith.constant 0 : index
    %c0_2 = arith.constant 0 : index
    %1 = vector.load %arg1[%c0_1, %c0_2] : memref<32x128xf32, #tpu.memory_space<vmem>>, vector<32x128xf32>
    %cst = arith.constant dense<0.000000e+00> : vector<16x128xf32>
    %2 = tpu.matmul %0, %1, %cst {dimension_numbers = #tpu.dot_dimension_numbers<[1], [0], [0], [1], [0, 0, 1, 1], [], []>} : vector<16x32xf32>, vector<32x128xf32>, vector<16x128xf32> -> vector<16x128xf32>
    %c0_3 = arith.constant 0 : index
    %c0_4 = arith.constant 0 : index
    %3 = vector.load %arg2[%c0_3, %c0_4] : memref<1x128xf32, #tpu.memory_space<vmem>>, vector<1x128xf32>
    %4 = vector.broadcast %3 : vector<1x128xf32> to vector<16x128xf32>
    %5 = arith.addf %2, %4 : vector<16x128xf32>
    %c0_5 = arith.constant 0 : index
    %c0_6 = arith.constant 0 : index
    %6 = vector.load %arg3[%c0_5, %c0_6] : memref<16x128xf32, #tpu.memory_space<vmem>>, vector<16x128xf32>
    tpu.vector_store %arg3[%c0_5, %c0_6], %5 {strides = array<i32>} : memref<16x128xf32, #tpu.memory_space<vmem>>, vector<16x128xf32>,
    return
  }
}

module attributes {stable_mosaic.version = 11 : i64} {
  func.func @_fused_gcn_kernel(%arg0: memref<1x48xi32, #tpu.memory_space<vmem>>, %arg1: memref<16x128xf32, #tpu.memory_space<vmem>>, %arg2: memref<48x128xf32, #tpu.memory_space<vmem>>, %arg3: memref<48x128xf32, #tpu.memory_space<vmem>>, %arg4: memref<48x32xf32, #tpu.memory_space<vmem>>, %arg5: memref<32x32xf32, #tpu.memory_space<vmem>>, %arg6: memref<1x32xf32, #tpu.memory_space<vmem>>, %arg7: memref<1x32xf32, #tpu.memory_space<vmem>>, %arg8: memref<1x32xf32, #tpu.memory_space<vmem>>, %arg9: memref<1x32xf32, #tpu.memory_space<vmem>>, %arg10: memref<1x32xf32, #tpu.memory_space<vmem>>, %arg11: memref<16x32xf32, #tpu.memory_space<vmem>>, %arg12: memref<48x32xf32, #tpu.memory_space<vmem>>) attributes {dimension_semantics = [], scalar_prefetch = 0 : i64, scratch_operands = 0 : i64, tpu.core_type = #tpu.core_type<tc>} {
    %c0 = arith.constant 0 : index
    %c0_0 = arith.constant 0 : index
    %0 = vector.load %arg4[%c0, %c0_0] : memref<48x32xf32, #tpu.memory_space<vmem>>, vector<48x32xf32>
    %c0_1 = arith.constant 0 : index
    %c0_2 = arith.constant 0 : index
    %1 = vector.load %arg5[%c0_1, %c0_2] : memref<32x32xf32, #tpu.memory_space<vmem>>, vector<32x32xf32>
    %cst = arith.constant dense<0.000000e+00> : vector<48x32xf32>
    %2 = tpu.matmul %0, %1, %cst {dimension_numbers = #tpu.dot_dimension_numbers<[1], [0], [0], [1], [0, 0, 1, 1], [], []>} : vector<48x32xf32>, vector<32x32xf32>, vector<48x32xf32> -> vector<48x32xf32>
    %c0_3 = arith.constant 0 : index
    %c0_4 = arith.constant 0 : index
    %3 = vector.load %arg6[%c0_3, %c0_4] : memref<1x32xf32, #tpu.memory_space<vmem>>, vector<1x32xf32>
    %4 = vector.broadcast %3 : vector<1x32xf32> to vector<48x32xf32>
    %5 = arith.addf %2, %4 : vector<48x32xf32>
    %c0_5 = arith.constant 0 : index
    %c0_6 = arith.constant 0 : index
    %6 = vector.load %arg1[%c0_5, %c0_6] : memref<16x128xf32, #tpu.memory_space<vmem>>, vector<16x32xf32>
    %c0_7 = arith.constant 0 : index
    %c32 = arith.constant 32 : index
    %7 = vector.load %arg3[%c0_7, %c32] : memref<48x128xf32, #tpu.memory_space<vmem>>, vector<48x32xf32>
    %c0_8 = arith.constant 0 : index
    %c64 = arith.constant 64 : index
    %8 = vector.load %arg2[%c0_8, %c64] : memref<48x128xf32, #tpu.memory_space<vmem>>, vector<48x32xf32>
    %c0_9 = arith.constant 0 : index
    %c96 = arith.constant 96 : index
    %9 = vector.load %arg3[%c0_9, %c96] : memref<48x128xf32, #tpu.memory_space<vmem>>, vector<48x32xf32>
    %10 = arith.addf %8, %9 : vector<48x32xf32>
    %11 = arith.addf %10, %5 : vector<48x32xf32>
    %12 = arith.negf %11 : vector<48x32xf32>
    %13 = math.exp %12 : vector<48x32xf32>
    %cst_10 = arith.constant 1.000000e+00 : f32
    %14 = vector.broadcast %cst_10 : f32 to vector<48x32xf32>
    %15 = arith.addf %14, %13 : vector<48x32xf32>
    %16 = arith.divf %14, %15 : vector<48x32xf32>
    %c0_11 = arith.constant 0 : index
    %c0_12 = arith.constant 0 : index
    %17 = vector.load %arg0[%c0_11, %c0_12] : memref<1x48xi32, #tpu.memory_space<vmem>>, vector<1x48xi32>
    %18 = tpu.iota {dimensions = array<i32: 0>} : vector<16x48xi32>
    %19 = vector.broadcast %17 : vector<1x48xi32> to vector<16x48xi32>
    %20 = arith.cmpi eq, %18, %19 : vector<16x48xi32>
    %21 = arith.extui %20 : vector<16x48xi1> to vector<16x48xi32>
    %22 = arith.sitofp %21 : vector<16x48xi32> to vector<16x48xf32>
    %23 = arith.mulf %16, %7 : vector<48x32xf32>
    %24 = tpu.concatenate %23, %16 in 1 : vector<48x32xf32>, vector<48x32xf32> -> vector<48x64xf32>
    %cst_13 = arith.constant dense<0.000000e+00> : vector<16x64xf32>
    %25 = tpu.matmul %22, %24, %cst_13 {dimension_numbers = #tpu.dot_dimension_numbers<[1], [0], [0], [1], [0, 0, 1, 1], [], []>} : vector<16x48xf32>, vector<48x64xf32>, vector<16x64xf32> -> vector<16x64xf32>
    %26 = vector.extract_strided_slice %25 {offsets = [0, 0], sizes = [16, 32], strides = [1, 1]} : vector<16x64xf32> to vector<16x32xf32>
    %27 = vector.extract_strided_slice %25 {offsets = [0, 32], sizes = [16, 32], strides = [1, 1]} : vector<16x64xf32> to vector<16x32xf32>
    %cst_14 = arith.constant 9.99999997E-7 : f32
    %28 = vector.broadcast %cst_14 : f32 to vector<16x32xf32>
    %29 = arith.addf %27, %28 : vector<16x32xf32>
    %30 = tpu.reciprocal %29 : vector<16x32xf32> -> vector<16x32xf32>
    %31 = arith.mulf %26, %30 : vector<16x32xf32>
    %32 = arith.addf %6, %31 : vector<16x32xf32>
    %c0_15 = arith.constant 0 : index
    %c0_16 = arith.constant 0 : index
    %33 = vector.load %arg7[%c0_15, %c0_16] : memref<1x32xf32, #tpu.memory_space<vmem>>, vector<1x32xf32>
    %c0_17 = arith.constant 0 : index
    %c0_18 = arith.constant 0 : index
    %34 = vector.load %arg8[%c0_17, %c0_18] : memref<1x32xf32, #tpu.memory_space<vmem>>, vector<1x32xf32>
    %cst_19 = arith.constant dense<0.000000e+00> : vector<32xf32>
    %35 = vector.multi_reduction <add>, %32, %cst_19 [0] : vector<16x32xf32> to vector<32xf32>
    %36 = vector.shape_cast %35 : vector<32xf32> to vector<1x32xf32>
    %cst_20 = arith.constant 1.600000e+01 : f32
    %37 = vector.broadcast %cst_20 : f32 to vector<1x32xf32>
    %38 = arith.divf %36, %37 : vector<1x32xf32>
    %39 = vector.broadcast %38 : vector<1x32xf32> to vector<16x32xf32>
    %40 = arith.subf %32, %39 : vector<16x32xf32>
    %41 = arith.mulf %40, %40 : vector<16x32xf32>
    %cst_21 = arith.constant dense<0.000000e+00> : vector<32xf32>
    %42 = vector.multi_reduction <add>, %41, %cst_21 [0] : vector<16x32xf32> to vector<32xf32>
    %43 = vector.shape_cast %42 : vector<32xf32> to vector<1x32xf32>
    %cst_22 = arith.constant 1.600000e+01 : f32
    %44 = vector.broadcast %cst_22 : f32 to vector<1x32xf32>
    %45 = arith.divf %43, %44 : vector<1x32xf32>
    %46 = vector.broadcast %38 : vector<1x32xf32> to vector<16x32xf32>
    %47 = arith.subf %32, %46 : vector<16x32xf32>
    %cst_23 = arith.constant 9.99999974E-6 : f32
    %48 = vector.broadcast %cst_23 : f32 to vector<1x32xf32>
    %49 = arith.addf %45, %48 : vector<1x32xf32>
    %50 = math.rsqrt %49 : vector<1x32xf32>
    %51 = vector.broadcast %50 : vector<1x32xf32> to vector<16x32xf32>
    %52 = arith.mulf %47, %51 : vector<16x32xf32>
    %53 = vector.broadcast %33 : vector<1x32xf32> to vector<16x32xf32>
    %54 = arith.mulf %52, %53 : vector<16x32xf32>
    %55 = vector.broadcast %34 : vector<1x32xf32> to vector<16x32xf32>
    %56 = arith.addf %54, %55 : vector<16x32xf32>
    %cst_24 = arith.constant 0.000000e+00 : f32
    %57 = vector.broadcast %cst_24 : f32 to vector<16x32xf32>
    %58 = arith.maximumf %56, %57 : vector<16x32xf32>
    %c0_25 = arith.constant 0 : index
    %c0_26 = arith.constant 0 : index
    %59 = vector.load %arg11[%c0_25, %c0_26] : memref<16x32xf32, #tpu.memory_space<vmem>>, vector<16x32xf32>
    tpu.vector_store %arg11[%c0_25, %c0_26], %58 {strides = array<i32>} : memref<16x32xf32, #tpu.memory_space<vmem>>, vector<16x32xf32>,
    %c0_27 = arith.constant 0 : index
    %c0_28 = arith.constant 0 : index
    %60 = vector.load %arg9[%c0_27, %c0_28] : memref<1x32xf32, #tpu.memory_space<vmem>>, vector<1x32xf32>
    %c0_29 = arith.constant 0 : index
    %c0_30 = arith.constant 0 : index
    %61 = vector.load %arg10[%c0_29, %c0_30] : memref<1x32xf32, #tpu.memory_space<vmem>>, vector<1x32xf32>
    %cst_31 = arith.constant dense<0.000000e+00> : vector<32xf32>
    %62 = vector.multi_reduction <add>, %11, %cst_31 [0] : vector<48x32xf32> to vector<32xf32>
    %63 = vector.shape_cast %62 : vector<32xf32> to vector<1x32xf32>
    %cst_32 = arith.constant 4.800000e+01 : f32
    %64 = vector.broadcast %cst_32 : f32 to vector<1x32xf32>
    %65 = arith.divf %63, %64 : vector<1x32xf32>
    %66 = vector.broadcast %65 : vector<1x32xf32> to vector<48x32xf32>
    %67 = arith.subf %11, %66 : vector<48x32xf32>
    %68 = arith.mulf %67, %67 : vector<48x32xf32>
    %cst_33 = arith.constant dense<0.000000e+00> : vector<32xf32>
    %69 = vector.multi_reduction <add>, %68, %cst_33 [0] : vector<48x32xf32> to vector<32xf32>
    %70 = vector.shape_cast %69 : vector<32xf32> to vector<1x32xf32>
    %cst_34 = arith.constant 4.800000e+01 : f32
    %71 = vector.broadcast %cst_34 : f32 to vector<1x32xf32>
    %72 = arith.divf %70, %71 : vector<1x32xf32>
    %73 = vector.broadcast %65 : vector<1x32xf32> to vector<48x32xf32>
    %74 = arith.subf %11, %73 : vector<48x32xf32>
    %cst_35 = arith.constant 9.99999974E-6 : f32
    %75 = vector.broadcast %cst_35 : f32 to vector<1x32xf32>
    %76 = arith.addf %72, %75 : vector<1x32xf32>
    %77 = math.rsqrt %76 : vector<1x32xf32>
    %78 = vector.broadcast %77 : vector<1x32xf32> to vector<48x32xf32>
    %79 = arith.mulf %74, %78 : vector<48x32xf32>
    %80 = vector.broadcast %60 : vector<1x32xf32> to vector<48x32xf32>
    %81 = arith.mulf %79, %80 : vector<48x32xf32>
    %82 = vector.broadcast %61 : vector<1x32xf32> to vector<48x32xf32>
    %83 = arith.addf %81, %82 : vector<48x32xf32>
    %cst_36 = arith.constant 0.000000e+00 : f32
    %84 = vector.broadcast %cst_36 : f32 to vector<48x32xf32>
    %85 = arith.maximumf %83, %84 : vector<48x32xf32>
    %c0_37 = arith.constant 0 : index
    %c0_38 = arith.constant 0 : index
    %86 = vector.load %arg12[%c0_37, %c0_38] : memref<48x32xf32, #tpu.memory_space<vmem>>, vector<48x32xf32>
    tpu.vector_store %arg12[%c0_37, %c0_38], %85 {strides = array<i32>} : memref<48x32xf32, #tpu.memory_space<vmem>>, vector<48x32xf32>,
    return
  }
}

</mosaic_0001>

<llo_original>
// kernel: gated_gcn_forward.2
$region0: #{gated_gcn_forward.2}
  #allocation0 [shape = 'u32[]', space=smem, size = 0x4, offset = 0x4, fixed_abs, tag = 'smem constant byte address 0x4 - core index']
  #allocation1 [shape = 'u32[144,128]{1,0:T(1,128)}', space=vmem, size = 0x12000, scoped, tag = 'internal scratch']
  %s0 = inlined_call_operand.vmem [shape: f32[16,32], index: 0, kind: input, shape index: {}]
  %s1 = inlined_call_operand.vmem [shape: f32[32,128], index: 1, kind: input, shape index: {}]
  %s2 = inlined_call_operand.vmem [shape: f32[1,128], index: 2, kind: input, shape index: {}]
  %s3 = inlined_call_operand.vmem [shape: f32[16,128], index: 3, kind: output, shape index: {}]
  %s4 = sld [smem:[#allocation0]]
  $region22: #{gated_gcn_forward.2} parent=0
    _
  %s6 = ssub.s32 1, %s4
  %s7 = scalar_select 0, %s6, %s4
  // Predicated region
  $region2: #{gated_gcn_forward.2} parent=0 // pred_check
    _
  $region3: #{gated_gcn_forward.2} parent=0 // pred_check_branch
    %9 = sbr.rel (0) target = $region5
  $region4: #{gated_gcn_forward.2} parent=0 // pred_region
    _
  $region5: #{gated_gcn_forward.2} parent=0 // pred_fallthru
    _
  // Predicated region
  $region6: #{gated_gcn_forward.2} parent=0 // pred_check
    _
  $region7: #{gated_gcn_forward.2} parent=0 // pred_check_branch
    %11 = sbr.rel (0) target = $region9
  $region8: #{gated_gcn_forward.2} parent=0 // pred_region
    _
  $region9: #{gated_gcn_forward.2} parent=0 // pred_fallthru
    _
  // Predicated region
  $region10: #{gated_gcn_forward.2} parent=0 // pred_check
    _
  $region11: #{gated_gcn_forward.2} parent=0 // pred_check_branch
    %13 = sbr.rel (0) target = $region13
  $region12: #{gated_gcn_forward.2} parent=0 // pred_region
    _
  $region13: #{gated_gcn_forward.2} parent=0 // pred_fallthru
    _
  %v14 = vld [vmem:[%s0] sm:$0xff]
  %v15 = vld [vmem:[%s0 + $0x8] sm:$0xff]
  %v16 = vld [vmem:[%s1] sm:$0xff]
  %v17 = vld [vmem:[%s1 + $0x8] sm:$0xff]
  %v18 = vld [vmem:[%s1 + $0x10] sm:$0xff]
  %v19 = vld [vmem:[%s1 + $0x18] sm:$0xff]
  %v20 = vld [vmem:[%s2] sm:$0x1]
  %v22 = vlaneseq
  %v23 = vshrl.u32 %v22, 7
  %v24 = vsub.s32 0, %v23
  %v25 = vrot.slane %v20, %v24
  %vm27 = vcmask 261120
  %v29 = vsel %vm27, %v14, 0
  %v32 = vsel %vm27, %v15, 0
  %34 = vmatprep.subr.mxu0 0.0
  %35 = vmatpush1.msra.mxu0 0.0
  %36 = vmatprep.subr.mxu0 0.0
  %37 = vmatpush1.msra.mxu0 0.0
  %38 = vmatprep.subr.mxu0 0.0
  %39 = vmatpush1.msra.mxu0 0.0
  %40 = vmatprep.subr.mxu0 0.0
  %41 = vmatpush1.msra.mxu0 0.0
  %42 = vmatprep.subr.mxu0 0.0
  %43 = vmatpush1.msra.mxu0 0.0
  %44 = vmatprep.subr.mxu0 0.0
  %45 = vmatpush1.msra.mxu0 0.0
  %46 = vmatprep.subr.mxu0 0.0
  %47 = vmatpush1.msra.mxu0 0.0
  %48 = vmatprep.subr.mxu0 0.0
  %49 = vmatpush1.msra.mxu0 0.0
  %50 = vmatprep.subr.mxu0 0.0
  %51 = vmatpush1.msra.mxu0 0.0
  %52 = vmatprep.subr.mxu0 0.0
  %53 = vmatpush1.msra.mxu0 0.0
  %54 = vmatprep.subr.mxu0 0.0
  %55 = vmatpush1.msra.mxu0 0.0
  %56 = vmatprep.subr.mxu0 0.0
  %57 = vmatpush1.msra.mxu0 0.0
  %58 = vmatprep.subr.mxu0 0.0
  %59 = vmatpush1.msra.mxu0 %v19
  %60 = vmatprep.subr.mxu0 0.0
  %61 = vmatpush1.msra.mxu0 %v18
  %62 = vmatprep.subr.mxu0 0.0
  %63 = vmatpush1.msra.mxu0 %v17
  %64 = vmatprep.subr.mxu0 0.0
  %65 = vmatpush1.msra.mxu0 %v16
  %66 = vmatprep.subr.mxu0 0.0
  %67 = vmatpush2.msra.mxu0 0.0
  %68 = vmatprep.subr.mxu0 0.0
  %69 = vmatpush2.msra.mxu0 0.0
  %70 = vmatprep.subr.mxu0 0.0
  %71 = vmatpush2.msra.mxu0 0.0
  %72 = vmatprep.subr.mxu0 0.0
  %73 = vmatpush2.msra.mxu0 0.0
  %74 = vmatprep.subr.mxu0 0.0
  %75 = vmatpush2.msra.mxu0 0.0
  %76 = vmatprep.subr.mxu0 0.0
  %77 = vmatpush2.msra.mxu0 0.0
  %78 = vmatprep.subr.mxu0 0.0
  %79 = vmatpush2.msra.mxu0 0.0
  %80 = vmatprep.subr.mxu0 0.0
  %81 = vmatpush2.msra.mxu0 0.0
  %82 = vmatprep.subr.mxu0 0.0
  %83 = vmatpush2.msra.mxu0 0.0
  %84 = vmatprep.subr.mxu0 0.0
  %85 = vmatpush2.msra.mxu0 0.0
  %86 = vmatprep.subr.mxu0 0.0
  %87 = vmatpush2.msra.mxu0 0.0
  %88 = vmatprep.subr.mxu0 0.0
  %89 = vmatpush2.msra.mxu0 0.0
  %90 = vmatprep.subr.mxu0 0.0
  %91 = vmatpush2.msra.mxu0 0.0
  %92 = vmatprep.subr.mxu0 0.0
  %93 = vmatpush2.msra.mxu0 0.0
  %94 = vmatprep.subr.mxu0 0.0
  %95 = vmatpush2.msra.mxu0 0.0
  %96 = vmatprep.subr.mxu0 0.0
  %97 = vmatpush2.msra.mxu0 0.0
  %98 = vmatprep.mubr.f32.mxu0 0.0
  %99 = vmatmul.mubr.f32.gmra.mxu0 %v29
  %v100 = vpop.f32.mrf.mxu0
  %v101 = vadd.f32 %v25, %v100
  %v102 = vpop.f32.mrf.mxu0
  %103 = vmatprep.mubr.f32.mxu0 0.0
  %104 = vmatmul.mubr.f32.gmra.mxu0 %v32
  %v105 = vpop.f32.mrf.mxu0
  %v106 = vadd.f32 %v25, %v105
  %v107 = vpop.f32.mrf.mxu0
  %108 = vdwg.mxu0
  %109 = vst [vmem:[%s3] sm:$0xff] %v101
  %110 = vst [vmem:[%s3 + $0x8] sm:$0xff] %v106
  // Predicated region
  $region14: #{gated_gcn_forward.2} parent=0 // pred_check
    _
  $region15: #{gated_gcn_forward.2} parent=0 // pred_check_branch
    %112 = sbr.rel (0) target = $region17
  $region16: #{gated_gcn_forward.2} parent=0 // pred_region
    _
  $region17: #{gated_gcn_forward.2} parent=0 // pred_fallthru
    _
  // Predicated region
  $region18: #{gated_gcn_forward.2} parent=0 // pred_check
    _
  $region19: #{gated_gcn_forward.2} parent=0 // pred_check_branch
    %114 = sbr.rel (0) target = $region21
  $region20: #{gated_gcn_forward.2} parent=0 // pred_region
    _
  $region21: #{gated_gcn_forward.2} parent=0 // pred_fallthru
    _

// kernel: gated_gcn_forward.3
$region0: #{gated_gcn_forward.3}
  #allocation0 [shape = 'u32[]', space=smem, size = 0x4, offset = 0x4, fixed_abs, tag = 'smem constant byte address 0x4 - core index']
  #allocation1 [shape = 'u32[144,128]{1,0:T(1,128)}', space=vmem, size = 0x12000, scoped, tag = 'internal scratch']
  %s0 = inlined_call_operand.vmem [shape: s32[1,48], index: 0, kind: input, shape index: {}]
  %s1 = inlined_call_operand.vmem [shape: f32[16,128], index: 1, kind: input, shape index: {}]
  %s2 = inlined_call_operand.vmem [shape: f32[48,128], index: 2, kind: input, shape index: {}]
  %s3 = inlined_call_operand.vmem [shape: f32[48,128], index: 3, kind: input, shape index: {}]
  %s4 = inlined_call_operand.vmem [shape: f32[48,32], index: 4, kind: input, shape index: {}]
  %s5 = inlined_call_operand.vmem [shape: f32[32,32], index: 5, kind: input, shape index: {}]
  %s6 = inlined_call_operand.vmem [shape: f32[1,32], index: 6, kind: input, shape index: {}]
  %s7 = inlined_call_operand.vmem [shape: f32[1,32], index: 7, kind: input, shape index: {}]
  %s8 = inlined_call_operand.vmem [shape: f32[1,32], index: 8, kind: input, shape index: {}]
  %s9 = inlined_call_operand.vmem [shape: f32[1,32], index: 9, kind: input, shape index: {}]
  %s10 = inlined_call_operand.vmem [shape: f32[1,32], index: 10, kind: input, shape index: {}]
  %s11 = inlined_call_operand.hbm [shape: f32[16,32], index: 11, kind: output, shape index: {0}]
  %s12 = inlined_call_operand.vmem [shape: f32[48,32], index: 12, kind: output, shape index: {1}]
  %13 = xla_tuple %s11, %s12
  %s14 = sld [smem:[#allocation0]]
  $region62: #{gated_gcn_forward.3} parent=0
    _
  %s16 = ssub.s32 1, %s14
  %s17 = scalar_select 0, %s16, %s14
  $region1: #{gated_gcn_forward.3} parent=0
    #allocation2 [shape = 'u8[8192]{0}', space=vmem, size = 0x2000, scoped, tag = 'output window, operand 0, single buffered']
    #allocation3 [shape = 's32[1]{0}', space=sflag, size = 0x4, scoped, tag = 'scoped memory for gated_gcn_forward.3']
    %18 = vsyncpa [#allocation3], 0
    // Predicated region
    $region2: #{gated_gcn_forward.3} parent=1 // pred_check
      _
    $region3: #{gated_gcn_forward.3} parent=1 // pred_check_branch
      %20 = sbr.rel (0) target = $region5
    $region4: #{gated_gcn_forward.3} parent=1 // pred_region
      _
    $region5: #{gated_gcn_forward.3} parent=1 // pred_fallthru
      _
    // Predicated region
    $region6: #{gated_gcn_forward.3} parent=1 // pred_check
      _
    $region7: #{gated_gcn_forward.3} parent=1 // pred_check_branch
      %22 = sbr.rel (0) target = $region9
    $region8: #{gated_gcn_forward.3} parent=1 // pred_region
      _
    $region9: #{gated_gcn_forward.3} parent=1 // pred_fallthru
      _
    // Predicated region
    $region10: #{gated_gcn_forward.3} parent=1 // pred_check
      _
    $region11: #{gated_gcn_forward.3} parent=1 // pred_check_branch
      %24 = sbr.rel (0) target = $region13
    $region12: #{gated_gcn_forward.3} parent=1 // pred_region
      _
    $region13: #{gated_gcn_forward.3} parent=1 // pred_fallthru
      _
    // Predicated region
    $region14: #{gated_gcn_forward.3} parent=1 // pred_check
      _
    $region15: #{gated_gcn_forward.3} parent=1 // pred_check_branch
      %26 = sbr.rel (0) target = $region17
    $region16: #{gated_gcn_forward.3} parent=1 // pred_region
      _
    $region17: #{gated_gcn_forward.3} parent=1 // pred_fallthru
      _
    // Predicated region
    $region18: #{gated_gcn_forward.3} parent=1 // pred_check
      _
    $region19: #{gated_gcn_forward.3} parent=1 // pred_check_branch
      %28 = sbr.rel (0) target = $region21
    $region20: #{gated_gcn_forward.3} parent=1 // pred_region
      _
    $region21: #{gated_gcn_forward.3} parent=1 // pred_fallthru
      _
    // Predicated region
    $region22: #{gated_gcn_forward.3} parent=1 // pred_check
      _
    $region23: #{gated_gcn_forward.3} parent=1 // pred_check_branch
      %30 = sbr.rel (0) target = $region25
    $region24: #{gated_gcn_forward.3} parent=1 // pred_region
      _
    $region25: #{gated_gcn_forward.3} parent=1 // pred_fallthru
      _
    // Predicated region
    $region26: #{gated_gcn_forward.3} parent=1 // pred_check
      _
    $region27: #{gated_gcn_forward.3} parent=1 // pred_check_branch
      %32 = sbr.rel (0) target = $region29
    $region28: #{gated_gcn_forward.3} parent=1 // pred_region
      _
    $region29: #{gated_gcn_forward.3} parent=1 // pred_fallthru
      _
    // Predicated region
    $region30: #{gated_gcn_forward.3} parent=1 // pred_check
      _
    $region31: #{gated_gcn_forward.3} parent=1 // pred_check_branch
      %34 = sbr.rel (0) target = $region33
    $region32: #{gated_gcn_forward.3} parent=1 // pred_region
      _
    $region33: #{gated_gcn_forward.3} parent=1 // pred_fallthru
      _
    // Predicated region
    $region34: #{gated_gcn_forward.3} parent=1 // pred_check
      _
    $region35: #{gated_gcn_forward.3} parent=1 // pred_check_branch
      %36 = sbr.rel (0) target = $region37
    $region36: #{gated_gcn_forward.3} parent=1 // pred_region
      _
    $region37: #{gated_gcn_forward.3} parent=1 // pred_fallthru
      _
    // Predicated region
    $region38: #{gated_gcn_forward.3} parent=1 // pred_check
      _
    $region39: #{gated_gcn_forward.3} parent=1 // pred_check_branch
      %38 = sbr.rel (0) target = $region41
    $region40: #{gated_gcn_forward.3} parent=1 // pred_region
      _
    $region41: #{gated_gcn_forward.3} parent=1 // pred_fallthru
      _
    // Predicated region
    $region42: #{gated_gcn_forward.3} parent=1 // pred_check
      _
    $region43: #{gated_gcn_forward.3} parent=1 // pred_check_branch
      %40 = sbr.rel (0) target = $region45
    $region44: #{gated_gcn_forward.3} parent=1 // pred_region
      _
    $region45: #{gated_gcn_forward.3} parent=1 // pred_fallthru
      _
    %v41 = vld [vmem:[%s4] sm:$0xff]
    %v42 = vld [vmem:[%s4 + $0x8] sm:$0xff]
    %v43 = vld [vmem:[%s4 + $0x10] sm:$0xff]
    %v44 = vld [vmem:[%s4 + $0x18] sm:$0xff]
    %v45 = vld [vmem:[%s4 + $0x20] sm:$0xff]
    %v46 = vld [vmem:[%s4 + $0x28] sm:$0xff]
    %v47 = vld [vmem:[%s5] sm:$0xff]
    %v48 = vld [vmem:[%s5 + $0x8] sm:$0xff]
    %v49 = vld [vmem:[%s5 + $0x10] sm:$0xff]
    %v50 = vld [vmem:[%s5 + $0x18] sm:$0xff]
    %v51 = vld [vmem:[%s6] sm:$0x1]
    %v53 = vlaneseq
    %v54 = vshrl.u32 %v53, 7
    %v55 = vsub.s32 0, %v54
    %v56 = vrot.slane %v51, %v55
    %vm58 = vcmask 261120
    %v60 = vsel %vm58, %v41, 0
    %v63 = vsel %vm58, %v42, 0
    %v66 = vsel %vm58, %v43, 0
    %v69 = vsel %vm58, %v44, 0
    %v72 = vsel %vm58, %v45, 0
    %v75 = vsel %vm58, %v46, 0
    %77 = vmatprep.subr.mxu0 0.0
    %78 = vmatpush1.msra.mxu0 0.0
    %79 = vmatprep.subr.mxu0 0.0
    %80 = vmatpush1.msra.mxu0 0.0
    %81 = vmatprep.subr.mxu0 0.0
    %82 = vmatpush1.msra.mxu0 0.0
    %83 = vmatprep.subr.mxu0 0.0
    %84 = vmatpush1.msra.mxu0 0.0
    %85 = vmatprep.subr.mxu0 0.0
    %86 = vmatpush1.msra.mxu0 0.0
    %87 = vmatprep.subr.mxu0 0.0
    %88 = vmatpush1.msra.mxu0 0.0
    %89 = vmatprep.subr.mxu0 0.0
    %90 = vmatpush1.msra.mxu0 0.0
    %91 = vmatprep.subr.mxu0 0.0
    %92 = vmatpush1.msra.mxu0 0.0
    %93 = vmatprep.subr.mxu0 0.0
    %94 = vmatpush1.msra.mxu0 0.0
    %95 = vmatprep.subr.mxu0 0.0
    %96 = vmatpush1.msra.mxu0 0.0
    %97 = vmatprep.subr.mxu0 0.0
    %98 = vmatpush1.msra.mxu0 0.0
    %99 = vmatprep.subr.mxu0 0.0
    %100 = vmatpush1.msra.mxu0 0.0
    %101 = vmatprep.subr.mxu0 0.0
    %102 = vmatpush1.msra.mxu0 %v50
    %103 = vmatprep.subr.mxu0 0.0
    %104 = vmatpush1.msra.mxu0 %v49
    %105 = vmatprep.subr.mxu0 0.0
    %106 = vmatpush1.msra.mxu0 %v48
    %107 = vmatprep.subr.mxu0 0.0
    %108 = vmatpush1.msra.mxu0 %v47
    %109 = vmatprep.subr.mxu0 0.0
    %110 = vmatpush2.msra.mxu0 0.0
    %111 = vmatprep.subr.mxu0 0.0
    %112 = vmatpush2.msra.mxu0 0.0
    %113 = vmatprep.subr.mxu0 0.0
    %114 = vmatpush2.msra.mxu0 0.0
    %115 = vmatprep.subr.mxu0 0.0
    %116 = vmatpush2.msra.mxu0 0.0
    %117 = vmatprep.subr.mxu0 0.0
    %118 = vmatpush2.msra.mxu0 0.0
    %119 = vmatprep.subr.mxu0 0.0
    %120 = vmatpush2.msra.mxu0 0.0
    %121 = vmatprep.subr.mxu0 0.0
    %122 = vmatpush2.msra.mxu0 0.0
    %123 = vmatprep.subr.mxu0 0.0
    %124 = vmatpush2.msra.mxu0 0.0
    %125 = vmatprep.subr.mxu0 0.0
    %126 = vmatpush2.msra.mxu0 0.0
    %127 = vmatprep.subr.mxu0 0.0
    %128 = vmatpush2.msra.mxu0 0.0
    %129 = vmatprep.subr.mxu0 0.0
    %130 = vmatpush2.msra.mxu0 0.0
    %131 = vmatprep.subr.mxu0 0.0
    %132 = vmatpush2.msra.mxu0 0.0
    %133 = vmatprep.subr.mxu0 0.0
    %134 = vmatpush2.msra.mxu0 0.0
    %135 = vmatprep.subr.mxu0 0.0
    %136 = vmatpush2.msra.mxu0 0.0
    %137 = vmatprep.subr.mxu0 0.0
    %138 = vmatpush2.msra.mxu0 0.0
    %139 = vmatprep.subr.mxu0 0.0
    %140 = vmatpush2.msra.mxu0 0.0
    %141 = vmatprep.mubr.f32.mxu0 0.0
    %142 = vmatmul.mubr.f32.gmra.mxu0 %v60
    %v143 = vpop.f32.mrf.mxu0
    %v144 = vadd.f32 %v56, %v143
    %v145 = vpop.f32.mrf.mxu0
    %146 = vmatprep.mubr.f32.mxu0 0.0
    %147 = vmatmul.mubr.f32.gmra.mxu0 %v63
    %v148 = vpop.f32.mrf.mxu0
    %v149 = vadd.f32 %v56, %v148
    %v150 = vpop.f32.mrf.mxu0
    %151 = vmatprep.mubr.f32.mxu0 0.0
    %152 = vmatmul.mubr.f32.gmra.mxu0 %v66
    %v153 = vpop.f32.mrf.mxu0
    %v154 = vadd.f32 %v56, %v153
    %v155 = vpop.f32.mrf.mxu0
    %156 = vmatprep.mubr.f32.mxu0 0.0
    %157 = vmatmul.mubr.f32.gmra.mxu0 %v69
    %v158 = vpop.f32.mrf.mxu0
    %v159 = vadd.f32 %v56, %v158
    %v160 = vpop.f32.mrf.mxu0
    %161 = vmatprep.mubr.f32.mxu0 0.0
    %162 = vmatmul.mubr.f32.gmra.mxu0 %v72
    %v163 = vpop.f32.mrf.mxu0
    %v164 = vadd.f32 %v56, %v163
    %v165 = vpop.f32.mrf.mxu0
    %166 = vmatprep.mubr.f32.mxu0 0.0
    %167 = vmatmul.mubr.f32.gmra.mxu0 %v75
    %v168 = vpop.f32.mrf.mxu0
    %v169 = vadd.f32 %v56, %v168
    %v170 = vpop.f32.mrf.mxu0
    %171 = vdwg.mxu0
    %v172 = vld [vmem:[%s1] sm:$0xff]
    %v173 = vld [vmem:[%s1 + $0x8] sm:$0xff]
    %v174 = vld [vmem:[%s3] sm:$0xff]
    %v175 = vld [vmem:[%s3 + $0x8] sm:$0xff]
    %v176 = vld [vmem:[%s3 + $0x10] sm:$0xff]
    %v177 = vld [vmem:[%s3 + $0x18] sm:$0xff]
    %v178 = vld [vmem:[%s3 + $0x20] sm:$0xff]
    %v179 = vld [vmem:[%s3 + $0x28] sm:$0xff]
    %v180 = vld [vmem:[%s2] sm:$0xff]
    %v181 = vld [vmem:[%s2 + $0x8] sm:$0xff]
    %v182 = vld [vmem:[%s2 + $0x10] sm:$0xff]
    %v183 = vld [vmem:[%s2 + $0x18] sm:$0xff]
    %v184 = vld [vmem:[%s2 + $0x20] sm:$0xff]
    %v185 = vld [vmem:[%s2 + $0x28] sm:$0xff]
    %192 = vrot.lane.b32.xlu0 %v174, 96
    %v193 = vpop.permute.xlu0 %192
    %194 = vrot.lane.b32.xlu0 %v175, 96
    %v195 = vpop.permute.xlu0 %194
    %196 = vrot.lane.b32.xlu0 %v176, 96
    %v197 = vpop.permute.xlu0 %196
    %198 = vrot.lane.b32.xlu0 %v177, 96
    %v199 = vpop.permute.xlu0 %198
    %200 = vrot.lane.b32.xlu0 %v178, 96
    %v201 = vpop.permute.xlu0 %200
    %202 = vrot.lane.b32.xlu0 %v179, 96
    %v203 = vpop.permute.xlu0 %202
    %v210 = vadd.f32 %v180, %v193
    %v211 = vadd.f32 %v181, %v195
    %v212 = vadd.f32 %v182, %v197
    %v213 = vadd.f32 %v183, %v199
    %v214 = vadd.f32 %v184, %v201
    %v215 = vadd.f32 %v185, %v203
    %222 = vrot.lane.b32.xlu0 %v144, 64
    %v223 = vpop.permute.xlu0 %222
    %224 = vrot.lane.b32.xlu0 %v149, 64
    %v225 = vpop.permute.xlu0 %224
    %226 = vrot.lane.b32.xlu0 %v154, 64
    %v227 = vpop.permute.xlu0 %226
    %228 = vrot.lane.b32.xlu0 %v159, 64
    %v229 = vpop.permute.xlu0 %228
    %230 = vrot.lane.b32.xlu0 %v164, 64
    %v231 = vpop.permute.xlu0 %230
    %232 = vrot.lane.b32.xlu0 %v169, 64
    %v233 = vpop.permute.xlu0 %232
    %v240 = vadd.f32 %v210, %v223
    %v241 = vadd.f32 %v211, %v225
    %v242 = vadd.f32 %v212, %v227
    %v243 = vadd.f32 %v213, %v229
    %v244 = vadd.f32 %v214, %v231
    %v245 = vadd.f32 %v215, %v233
    %v246 = vxor.u32 %v240, 2147483648
    %v247 = vxor.u32 %v241, 2147483648
    %v248 = vxor.u32 %v242, 2147483648
    %v249 = vxor.u32 %v243, 2147483648
    %v250 = vxor.u32 %v244, 2147483648
    %v251 = vxor.u32 %v245, 2147483648
    %v252 = vmul.f32 %v246, 1.442695
    %v253 = vpow.pop %v252
    %v254 = vmul.f32 %v247, 1.442695
    %v255 = vpow.pop %v254
    %v256 = vmul.f32 %v248, 1.442695
    %v257 = vpow.pop %v256
    %v258 = vmul.f32 %v249, 1.442695
    %v259 = vpow.pop %v258
    %v260 = vmul.f32 %v250, 1.442695
    %v261 = vpow.pop %v260
    %v262 = vmul.f32 %v251, 1.442695
    %v263 = vpow.pop %v262
    %v264 = vadd.f32 %v253, 1.0
    %v265 = vadd.f32 %v255, 1.0
    %v266 = vadd.f32 %v257, 1.0
    %v267 = vadd.f32 %v259, 1.0
    %v268 = vadd.f32 %v261, 1.0
    %v269 = vadd.f32 %v263, 1.0
    %v270 = vrcp.pop %v264
    %v271 = vmul.f32 1.0, %v270
    %v272 = vrcp.pop %v265
    %v273 = vmul.f32 1.0, %v272
    %v274 = vrcp.pop %v266
    %v275 = vmul.f32 1.0, %v274
    %v276 = vrcp.pop %v267
    %v277 = vmul.f32 1.0, %v276
    %v278 = vrcp.pop %v268
    %v279 = vmul.f32 1.0, %v278
    %v280 = vrcp.pop %v269
    %v281 = vmul.f32 1.0, %v280
    %v282 = vld [vmem:[%s0] sm:$0x1]
    %v283 = vlaneseq
    %v284 = vshrl.u32 %v283, 7
    %v285 = vadd.s32 %v284, 8
    %v286 = vlaneseq
    %v287 = vshrl.u32 %v286, 7
    %v288 = vsub.s32 0, %v287
    %v289 = vrot.slane %v282, %v288
    %vm290 = vcmp.eq.s32.totalorder %v284, %v289
    %vm291 = vcmp.eq.s32.totalorder %v285, %v289
    %v292 = vsel %vm290, 1, 0
    %v293 = vsel %vm291, 1, 0
    %v294 = vcvt.s32.f32 %v292
    %v295 = vcvt.s32.f32 %v293
    %296 = vrot.lane.b32.xlu0 %v174, 32
    %v297 = vpop.permute.xlu0 %296
    %298 = vrot.lane.b32.xlu0 %v175, 32
    %v299 = vpop.permute.xlu0 %298
    %300 = vrot.lane.b32.xlu0 %v176, 32
    %v301 = vpop.permute.xlu0 %300
    %302 = vrot.lane.b32.xlu0 %v177, 32
    %v303 = vpop.permute.xlu0 %302
    %304 = vrot.lane.b32.xlu0 %v178, 32
    %v305 = vpop.permute.xlu0 %304
    %306 = vrot.lane.b32.xlu0 %v179, 32
    %v307 = vpop.permute.xlu0 %306
    %v314 = vmul.f32 %v271, %v297
    %v315 = vmul.f32 %v273, %v299
    %v316 = vmul.f32 %v275, %v301
    %v317 = vmul.f32 %v277, %v303
    %v318 = vmul.f32 %v279, %v305
    %v319 = vmul.f32 %v281, %v307
    %326 = vrot.lane.b32.xlu0 %v314, 64
    %v327 = vpop.permute.xlu0 %326
    %328 = vrot.lane.b32.xlu0 %v315, 64
    %v329 = vpop.permute.xlu0 %328
    %330 = vrot.lane.b32.xlu0 %v316, 64
    %v331 = vpop.permute.xlu0 %330
    %332 = vrot.lane.b32.xlu0 %v317, 64
    %v333 = vpop.permute.xlu0 %332
    %334 = vrot.lane.b32.xlu0 %v318, 64
    %v335 = vpop.permute.xlu0 %334
    %336 = vrot.lane.b32.xlu0 %v319, 64
    %v337 = vpop.permute.xlu0 %336
    %350 = vrot.lane.b32.xlu0 %v271, 96
    %v351 = vpop.permute.xlu0 %350
    %352 = vrot.lane.b32.xlu0 %v273, 96
    %v353 = vpop.permute.xlu0 %352
    %354 = vrot.lane.b32.xlu0 %v275, 96
    %v355 = vpop.permute.xlu0 %354
    %356 = vrot.lane.b32.xlu0 %v277, 96
    %v357 = vpop.permute.xlu0 %356
    %358 = vrot.lane.b32.xlu0 %v279, 96
    %v359 = vpop.permute.xlu0 %358
    %360 = vrot.lane.b32.xlu0 %v281, 96
    %v361 = vpop.permute.xlu0 %360
    %v368 = vsel %vm58, %v327, %v351
    %v369 = vsel %vm58, %v329, %v353
    %v370 = vsel %vm58, %v331, %v355
    %v371 = vsel %vm58, %v333, %v357
    %v372 = vsel %vm58, %v335, %v359
    %v373 = vsel %vm58, %v337, %v361
    %vm374 = vcmask 392192
    %v376 = vsel %vm374, %v294, 0
    %v379 = vsel %vm374, %v295, 0
    %381 = vmatprep.subr.mxu0 0.0
    %382 = vmatpush1.msra.mxu0 0.0
    %383 = vmatprep.subr.mxu0 0.0
    %384 = vmatpush1.msra.mxu0 0.0
    %385 = vmatprep.subr.mxu0 0.0
    %386 = vmatpush1.msra.mxu0 0.0
    %387 = vmatprep.subr.mxu0 0.0
    %388 = vmatpush1.msra.mxu0 0.0
    %389 = vmatprep.subr.mxu0 0.0
    %390 = vmatpush1.msra.mxu0 0.0
    %391 = vmatprep.subr.mxu0 0.0
    %392 = vmatpush1.msra.mxu0 0.0
    %393 = vmatprep.subr.mxu0 0.0
    %394 = vmatpush1.msra.mxu0 0.0
    %395 = vmatprep.subr.mxu0 0.0
    %396 = vmatpush1.msra.mxu0 0.0
    %397 = vmatprep.subr.mxu0 0.0
    %398 = vmatpush1.msra.mxu0 0.0
    %399 = vmatprep.subr.mxu0 0.0
    %400 = vmatpush1.msra.mxu0 0.0
    %401 = vmatprep.subr.mxu0 0.0
    %402 = vmatpush1.msra.mxu0 %v373
    %403 = vmatprep.subr.mxu0 0.0
    %404 = vmatpush1.msra.mxu0 %v372
    %405 = vmatprep.subr.mxu0 0.0
    %406 = vmatpush1.msra.mxu0 %v371
    %407 = vmatprep.subr.mxu0 0.0
    %408 = vmatpush1.msra.mxu0 %v370
    %409 = vmatprep.subr.mxu0 0.0
    %410 = vmatpush1.msra.mxu0 %v369
    %411 = vmatprep.subr.mxu0 0.0
    %412 = vmatpush1.msra.mxu0 %v368
    %413 = vmatprep.subr.mxu0 0.0
    %414 = vmatpush2.msra.mxu0 0.0
    %415 = vmatprep.subr.mxu0 0.0
    %416 = vmatpush2.msra.mxu0 0.0
    %417 = vmatprep.subr.mxu0 0.0
    %418 = vmatpush2.msra.mxu0 0.0
    %419 = vmatprep.subr.mxu0 0.0
    %420 = vmatpush2.msra.mxu0 0.0
    %421 = vmatprep.subr.mxu0 0.0
    %422 = vmatpush2.msra.mxu0 0.0
    %423 = vmatprep.subr.mxu0 0.0
    %424 = vmatpush2.msra.mxu0 0.0
    %425 = vmatprep.subr.mxu0 0.0
    %426 = vmatpush2.msra.mxu0 0.0
    %427 = vmatprep.subr.mxu0 0.0
    %428 = vmatpush2.msra.mxu0 0.0
    %429 = vmatprep.subr.mxu0 0.0
    %430 = vmatpush2.msra.mxu0 0.0
    %431 = vmatprep.subr.mxu0 0.0
    %432 = vmatpush2.msra.mxu0 0.0
    %433 = vmatprep.subr.mxu0 0.0
    %434 = vmatpush2.msra.mxu0 0.0
    %435 = vmatprep.subr.mxu0 0.0
    %436 = vmatpush2.msra.mxu0 0.0
    %437 = vmatprep.subr.mxu0 0.0
    %438 = vmatpush2.msra.mxu0 0.0
    %439 = vmatprep.subr.mxu0 0.0
    %440 = vmatpush2.msra.mxu0 0.0
    %441 = vmatprep.subr.mxu0 0.0
    %442 = vmatpush2.msra.mxu0 0.0
    %443 = vmatprep.subr.mxu0 0.0
    %444 = vmatpush2.msra.mxu0 0.0
    %445 = vmatprep.mubr.f32.mxu0 0.0
    %446 = vmatmul.mubr.f32.gmra.mxu0 %v376
    %v447 = vpop.f32.mrf.mxu0
    %v448 = vadd.f32 0.0, %v447
    %v449 = vpop.f32.mrf.mxu0
    %450 = vmatprep.mubr.f32.mxu0 0.0
    %451 = vmatmul.mubr.f32.gmra.mxu0 %v379
    %v452 = vpop.f32.mrf.mxu0
    %v453 = vadd.f32 0.0, %v452
    %v454 = vpop.f32.mrf.mxu0
    %455 = vdwg.mxu0
    %v456 = vadd.f32 %v448, 1e-06
    %v457 = vadd.f32 %v453, 1e-06
    %v458 = vrcp.pop %v456
    %v459 = vrcp.pop %v457
    %462 = vrot.lane.b32.xlu0 %v458, 96
    %v463 = vpop.permute.xlu0 %462
    %464 = vrot.lane.b32.xlu0 %v459, 96
    %v465 = vpop.permute.xlu0 %464
    %v468 = vmul.f32 %v448, %v463
    %v469 = vmul.f32 %v453, %v465
    %v470 = vadd.f32 %v172, %v468
    %v471 = vadd.f32 %v173, %v469
    %v472 = vld [vmem:[%s7] sm:$0x1]
    %v473 = vld [vmem:[%s8] sm:$0x1]
    %v474 = vsel %vm58, %v470, 0.0
    %v475 = vsel %vm58, %v471, 0.0
    %v476 = vadd.f32 %v474, %v475
    %v477 = vrot.slane %v476, 4
    %v478 = vadd.f32 %v476, %v477
    %v479 = vrot.slane %v478, 2
    %v480 = vadd.f32 %v478, %v479
    %v481 = vrot.slane %v480, 1
    %v482 = vadd.f32 %v480, %v481
    %v483 = vrcp.pop 16.0
    %v484 = vmul.f32 %v482, %v483
    %v485 = vsub.f32 %v470, %v484
    %v486 = vsub.f32 %v471, %v484
    %v487 = vmul.f32 %v485, %v485
    %v488 = vmul.f32 %v486, %v486
    %v489 = vsel %vm58, %v487, 0.0
    %v490 = vsel %vm58, %v488, 0.0
    %v491 = vadd.f32 %v489, %v490
    %v492 = vrot.slane %v491, 4
    %v493 = vadd.f32 %v491, %v492
    %v494 = vrot.slane %v493, 2
    %v495 = vadd.f32 %v493, %v494
    %v496 = vrot.slane %v495, 1
    %v497 = vadd.f32 %v495, %v496
    %v498 = vmul.f32 %v497, %v483
    %v499 = vadd.f32 %v498, 1e-05
    %v500 = vrsqrt.pop %v499
    %v501 = vmul.f32 %v485, %v500
    %v502 = vmul.f32 %v486, %v500
    %v504 = vlaneseq
    %v505 = vshrl.u32 %v504, 7
    %v506 = vsub.s32 0, %v505
    %v507 = vrot.slane %v472, %v506
    %v509 = vmul.f32 %v501, %v507
    %v510 = vmul.f32 %v502, %v507
    %v512 = vlaneseq
    %v513 = vshrl.u32 %v512, 7
    %v514 = vsub.s32 0, %v513
    %v515 = vrot.slane %v473, %v514
    %v517 = vadd.f32 %v509, %v515
    %v518 = vadd.f32 %v510, %v515
    %v519 = vmax.f32 %v517, 0.0
    %v520 = vmax.f32 %v518, 0.0
    %521 = vst.msk [vmem:[#allocation2] sm:$0xff] %vm58, %v519
    %522 = vst.msk [vmem:[#allocation2 + $0x8] sm:$0xff] %vm58, %v520
    %v523 = vld [vmem:[%s9] sm:$0x1]
    %v524 = vld [vmem:[%s10] sm:$0x1]
    %vm525 = vcmask 785920
    %v526 = vsel %vm525, %v240, 0.0
    %v527 = vsel %vm525, %v241, 0.0
    %v528 = vadd.f32 %v526, %v527
    %v529 = vsel %vm525, %v242, 0.0
    %v530 = vadd.f32 %v528, %v529
    %v531 = vsel %vm525, %v243, 0.0
    %v532 = vadd.f32 %v530, %v531
    %v533 = vsel %vm525, %v244, 0.0
    %v534 = vadd.f32 %v532, %v533
    %v535 = vsel %vm525, %v245, 0.0
    %v536 = vadd.f32 %v534, %v535
    %v537 = vrot.slane %v536, 4
    %v538 = vadd.f32 %v536, %v537
    %v539 = vrot.slane %v538, 2
    %v540 = vadd.f32 %v538, %v539
    %v541 = vrot.slane %v540, 1
    %v542 = vadd.f32 %v540, %v541
    %v543 = vrcp.pop 48.0
    %v544 = vmul.f32 %v542, %v543
    %v545 = vsub.f32 %v240, %v544
    %v546 = vsub.f32 %v241, %v544
    %v547 = vsub.f32 %v242, %v544
    %v548 = vsub.f32 %v243, %v544
    %v549 = vsub.f32 %v244, %v544
    %v550 = vsub.f32 %v245, %v544
    %v551 = vmul.f32 %v545, %v545
    %v552 = vmul.f32 %v546, %v546
    %v553 = vmul.f32 %v547, %v547
    %v554 = vmul.f32 %v548, %v548
    %v555 = vmul.f32 %v549, %v549
    %v556 = vmul.f32 %v550, %v550
    %v557 = vsel %vm525, %v551, 0.0
    %v558 = vsel %vm525, %v552, 0.0
    %v559 = vadd.f32 %v557, %v558
    %v560 = vsel %vm525, %v553, 0.0
    %v561 = vadd.f32 %v559, %v560
    %v562 = vsel %vm525, %v554, 0.0
    %v563 = vadd.f32 %v561, %v562
    %v564 = vsel %vm525, %v555, 0.0
    %v565 = vadd.f32 %v563, %v564
    %v566 = vsel %vm525, %v556, 0.0
    %v567 = vadd.f32 %v565, %v566
    %v568 = vrot.slane %v567, 4
    %v569 = vadd.f32 %v567, %v568
    %v570 = vrot.slane %v569, 2
    %v571 = vadd.f32 %v569, %v570
    %v572 = vrot.slane %v571, 1
    %v573 = vadd.f32 %v571, %v572
    %v574 = vmul.f32 %v573, %v543
    %v575 = vadd.f32 %v574, 1e-05
    %v576 = vrsqrt.pop %v575
    %v577 = vmul.f32 %v545, %v576
    %v578 = vmul.f32 %v546, %v576
    %v579 = vmul.f32 %v547, %v576
    %v580 = vmul.f32 %v548, %v576
    %v581 = vmul.f32 %v549, %v576
    %v582 = vmul.f32 %v550, %v576
    %v584 = vlaneseq
    %v585 = vshrl.u32 %v584, 7
    %v586 = vsub.s32 0, %v585
    %v587 = vrot.slane %v523, %v586
    %588 = vrot.lane.b32.xlu0 %v587, 64
    %v589 = vpop.permute.xlu0 %588
    %v591 = vmul.f32 %v577, %v589
    %v592 = vmul.f32 %v578, %v589
    %v593 = vmul.f32 %v579, %v589
    %v594 = vmul.f32 %v580, %v589
    %v595 = vmul.f32 %v581, %v589
    %v596 = vmul.f32 %v582, %v589
    %v598 = vlaneseq
    %v599 = vshrl.u32 %v598, 7
    %v600 = vsub.s32 0, %v599
    %v601 = vrot.slane %v524, %v600
    %602 = vrot.lane.b32.xlu0 %v601, 64
    %v603 = vpop.permute.xlu0 %602
    %v605 = vadd.f32 %v591, %v603
    %v606 = vadd.f32 %v592, %v603
    %v607 = vadd.f32 %v593, %v603
    %v608 = vadd.f32 %v594, %v603
    %v609 = vadd.f32 %v595, %v603
    %v610 = vadd.f32 %v596, %v603
    %v611 = vmax.f32 %v605, 0.0
    %v612 = vmax.f32 %v606, 0.0
    %v613 = vmax.f32 %v607, 0.0
    %v614 = vmax.f32 %v608, 0.0
    %v615 = vmax.f32 %v609, 0.0
    %v616 = vmax.f32 %v610, 0.0
    %623 = vrot.lane.b32.xlu0 %v611, 64
    %v624 = vpop.permute.xlu0 %623
    %625 = vrot.lane.b32.xlu0 %v612, 64
    %v626 = vpop.permute.xlu0 %625
    %627 = vrot.lane.b32.xlu0 %v613, 64
    %v628 = vpop.permute.xlu0 %627
    %629 = vrot.lane.b32.xlu0 %v614, 64
    %v630 = vpop.permute.xlu0 %629
    %631 = vrot.lane.b32.xlu0 %v615, 64
    %v632 = vpop.permute.xlu0 %631
    %633 = vrot.lane.b32.xlu0 %v616, 64
    %v634 = vpop.permute.xlu0 %633
    %641 = vst.msk [vmem:[%s12] sm:$0xff] %vm58, %v624
    %642 = vst.msk [vmem:[%s12 + $0x8] sm:$0xff] %vm58, %v626
    %643 = vst.msk [vmem:[%s12 + $0x10] sm:$0xff] %vm58, %v628
    %644 = vst.msk [vmem:[%s12 + $0x18] sm:$0xff] %vm58, %v630
    %645 = vst.msk [vmem:[%s12 + $0x20] sm:$0xff] %vm58, %v632
    %646 = vst.msk [vmem:[%s12 + $0x28] sm:$0xff] %vm58, %v634
    // Predicated region
    $region46: #{gated_gcn_forward.3} parent=1 // pred_check
      _
    $region47: #{gated_gcn_forward.3} parent=1 // pred_check_branch
      %648 = sbr.rel (0) target = $region49
    $region48: #{gated_gcn_forward.3} parent=1 // pred_region
      %s650 = ssub.s32 256, 256
      %651 = vsyncadd [#allocation3], %s650
      %s652 = sshll.u32 [#allocation2], 4
      %s653 = int_to_ptr.vmem [resolvable:$true] %s652
      %658 = dma.vmem_to_hbm [thread:$0]  %s653, 256, %s11, [#allocation3], 128, 128, 8
    $region49: #{gated_gcn_forward.3} parent=1 // pred_fallthru
      _
    // Predicated region
    $region50: #{gated_gcn_forward.3} parent=1 // pred_check
      _
    $region51: #{gated_gcn_forward.3} parent=1 // pred_check_branch
      %660 = sbr.rel (0) target = $region53
    $region52: #{gated_gcn_forward.3} parent=1 // pred_region
      _
    $region53: #{gated_gcn_forward.3} parent=1 // pred_fallthru
      _
    // Predicated region
    $region54: #{gated_gcn_forward.3} parent=1 // pred_check
      _
    $region55: #{gated_gcn_forward.3} parent=1 // pred_check_branch
      %662 = sbr.rel (0) target = $region57
    $region56: #{gated_gcn_forward.3} parent=1 // pred_region
      %663 = dma.done [#allocation3], 256
    $region57: #{gated_gcn_forward.3} parent=1 // pred_fallthru
      _
    // Predicated region
    $region58: #{gated_gcn_forward.3} parent=1 // pred_check
      _
    $region59: #{gated_gcn_forward.3} parent=1 // pred_check_branch
      %665 = sbr.rel (0) target = $region61
    $region60: #{gated_gcn_forward.3} parent=1 // pred_region
      _
    $region61: #{gated_gcn_forward.3} parent=1 // pred_fallthru
      _
    %666 = vsyncpa [#allocation3], 1

</llo_original>
